<compile_context>
chip_gen: v5e
topology: v5e:2x2
jax: 0.10.0
libtpu: 0.0.40
codegen_flags: <defaults>
</compile_context>

<pallas_src>
import jax
import jax.numpy as jnp
from jax.experimental import pallas as pl
from jax.experimental.pallas import tpu as pltpu


def _bahdanau_kernel(q_ref, k_ref, wa_ref, ua_ref, bias_ref, va_ref, out_ref):
    # q_ref:    (TB, H)      queries for TB batch elements
    # k_ref:    (TB, S, H)   keys for TB batch elements
    # wa_ref:   (H, H)       Wa^T          (constant across grid steps)
    # ua_ref:   (H, H)       Ua^T          (constant across grid steps)
    # bias_ref: (1, H)       wa_b + ua_b   (combined; Va bias dropped)
    # va_ref:   (1, H)       Va weight as a row vector
    # out_ref:  (TB, H)      context vectors
    TB, S, H = k_ref.shape

    k3 = k_ref[...]                                   # (TB, S, H)
    k2 = k3.reshape(TB * S, H)                        # lane dim unchanged

    # Ua(keys): one large (TB*S, H) @ (H, H) MXU matmul.
    kU = jnp.dot(k2, ua_ref[...], preferred_element_type=jnp.float32)

    # Wa(query) + (wa_b + ua_b): (TB, H) @ (H, H).
    qW = jnp.dot(q_ref[...], wa_ref[...],
                 preferred_element_type=jnp.float32) + bias_ref[...]

    # Replicate row b of qW onto rows [b*S, (b+1)*S) with a one-hot expansion
    # matmul (stays on the MXU; avoids a sublane-relayout broadcast).
    row = jax.lax.broadcasted_iota(jnp.int32, (TB * S, TB), 0)
    col = jax.lax.broadcasted_iota(jnp.int32, (TB * S, TB), 1)
    expand = jnp.logical_and(row >= col * S, row < (col + 1) * S)
    qW_rep = jnp.dot(expand.astype(jnp.float32), qW,
                     preferred_element_type=jnp.float32)       # (TB*S, H)

    t = jnp.tanh(kU + qW_rep)                                  # (TB*S, H)

    # Va projection on VPU/XLU: elementwise mul + lane reduce (no N=1 matmul).
    scores = jnp.sum(t * va_ref[...], axis=-1, keepdims=True)  # (TB*S, 1)
    s3 = scores.reshape(TB, S, 1)                              # group per batch elem

    # Numerically stable softmax over S for each batch element.
    m = jnp.max(s3, axis=1, keepdims=True)                     # (TB, 1, 1)
    e = jnp.exp(s3 - m)                                        # (TB, S, 1)
    denom = jnp.sum(e, axis=1, keepdims=True)                  # (TB, 1, 1)
    w = e * pl.reciprocal(denom, approx=False)                 # (TB, S, 1)

    # context[b] = sum_s w[b, s] * keys[b, s, :]
    ctx = jnp.sum(w * k3, axis=1)                              # (TB, H)
    out_ref[...] = ctx.astype(out_ref.dtype)


def _pick_tb(batch, seq, hidden, *, keys_block_budget_bytes=8 * 1024 * 1024):
    """Batch elements per grid step.

    TB must divide B and keep the (TB, H) query/output blocks legal under the
    (8, 128) tiling rule (TB % 8 == 0 or TB == B).  Prefer enough rows to fill
    the MXU (TB*S >= 256) while keeping >= 4 grid steps (DMA pipelining and
    v7x's two TensorCores), with the double-buffered keys block under a
    conservative VMEM budget that is safe on v7x's 64 MiB VMEM.
    """
    cands = [d for d in range(1, batch + 1)
             if batch % d == 0
             and (d % 8 == 0 or d == batch)
             and 2 * d * seq * hidden * 4 <= keys_block_budget_bytes]
    if not cands:
        return batch  # tiny B or huge S*H: fall back to one full-batch block
    for pred in (lambda d: d * seq >= 256 and batch // d >= 4,
                 lambda d: d * seq >= 256):
        good = [d for d in cands if pred(d)]
        if good:
            return min(good)
    return max(cands)


def bahdanau_attention(query, keys, wa_w, wa_b, ua_w, ua_b, va_w, va_b, *, tb=None):
    """query: (B, 1, H), keys: (B, S, H). PyTorch Linear weights are (out, in)."""
    B, _, H = query.shape
    _, S, _ = keys.shape
    TB = _pick_tb(B, S, H) if tb is None else tb
    assert B % TB == 0, (B, TB)

    # Pre-transpose weights so the kernel does plain x @ W; fold the two biases
    # into one vector and drop the Va bias (softmax is shift-invariant).
    wa_t = jnp.asarray(wa_w, jnp.float32).T                     # (H, H)
    ua_t = jnp.asarray(ua_w, jnp.float32).T                     # (H, H)
    va_row = jnp.asarray(va_w, jnp.float32).reshape(1, H)       # (1, H)
    bias = (jnp.asarray(wa_b, jnp.float32)
            + jnp.asarray(ua_b, jnp.float32)).reshape(1, H)     # (1, H)

    q2 = query.astype(jnp.float32).reshape(B, H)                # (B, H)
    k3 = keys.astype(jnp.float32)                               # (B, S, H)

    grid_spec = pltpu.PrefetchScalarGridSpec(
        num_scalar_prefetch=0,
        grid=(B // TB,),
        in_specs=[
            pl.BlockSpec((TB, H), lambda b: (b, 0)),        # queries
            pl.BlockSpec((TB, S, H), lambda b: (b, 0, 0)),  # keys
            pl.BlockSpec((H, H), lambda b: (0, 0)),         # Wa^T
            pl.BlockSpec((H, H), lambda b: (0, 0)),         # Ua^T
            pl.BlockSpec((1, H), lambda b: (0, 0)),         # wa_b + ua_b
            pl.BlockSpec((1, H), lambda b: (0, 0)),         # Va row
        ],
        out_specs=pl.BlockSpec((TB, H), lambda b: (b, 0)),
    )

    out2 = pl.pallas_call(
        _bahdanau_kernel,
        out_shape=jax.ShapeDtypeStruct((B, H), jnp.float32),
        grid_spec=grid_spec,
        compiler_params=pltpu.CompilerParams(
            dimension_semantics=("parallel",),
            vmem_limit_bytes=32 * 1024 * 1024),
    )(q2, k3, wa_t, ua_t, bias, va_row)

    # TODO(synk): for very large H a fully lane-dense (multiple-of-128) output
    # block would need a sublane->lane relayout in-kernel; skipped for safety.
    return out2.reshape(B, 1, H)


def _reference(query, keys, wa_w, wa_b, ua_w, ua_b, va_w, va_b):
    # Pure-JAX reference matching the PyTorch forward exactly (incl. Va bias).
    qW = query @ wa_w.T + wa_b                   # (B, 1, H)
    kU = keys @ ua_w.T + ua_b                    # (B, S, H)
    scores = jnp.tanh(qW + kU) @ va_w.T + va_b   # (B, S, 1)
    scores = jnp.transpose(scores, (0, 2, 1))    # (B, 1, S)
    weights = jax.nn.softmax(scores, axis=-1)    # (B, 1, S)
    return weights @ keys                        # (B, 1, H)


if __name__ == "__main__":
    B, S, H = 2, 8, 32

    key = jax.random.PRNGKey(0)
    k_q, k_k, k_wa, k_ba, k_ua, k_bu, k_va, k_bv = jax.random.split(key, 8)

    query = jax.random.normal(k_q, (B, 1, H), jnp.float32)
    keys_ = jax.random.normal(k_k, (B, S, H), jnp.float32)

    # Deterministic "Linear" parameter init (PyTorch-style shapes: weight (out, in)).
    bound = 1.0 / (H ** 0.5)
    wa_w = jax.random.uniform(k_wa, (H, H), jnp.float32, -bound, bound)
    wa_b = jax.random.uniform(k_ba, (H,), jnp.float32, -bound, bound)
    ua_w = jax.random.uniform(k_ua, (H, H), jnp.float32, -bound, bound)
    ua_b = jax.random.uniform(k_bu, (H,), jnp.float32, -bound, bound)
    va_w = jax.random.uniform(k_va, (1, H), jnp.float32, -bound, bound)
    va_b = jax.random.uniform(k_bv, (1,), jnp.float32, -bound, bound)

    out = bahdanau_attention(query, keys_, wa_w, wa_b, ua_w, ua_b, va_w, va_b)
    out = jax.block_until_ready(out)

    ref = _reference(query, keys_, wa_w, wa_b, ua_w, ua_b, va_w, va_b)
    assert out.shape == (B, 1, H)
    assert jnp.allclose(out, ref, atol=1e-5, rtol=1e-5), \
        float(jnp.max(jnp.abs(out - ref)))

    print("KERNEL_OK")
</pallas_src>

<mosaic_0001>
module attributes {stable_mosaic.version = 11 : i64} {
  func.func @_bahdanau_kernel(%arg0: i32, %arg1: memref<2x32xf32, #tpu.memory_space<vmem>>, %arg2: memref<2x8x32xf32, #tpu.memory_space<vmem>>, %arg3: memref<32x32xf32, #tpu.memory_space<vmem>>, %arg4: memref<32x32xf32, #tpu.memory_space<vmem>>, %arg5: memref<1x32xf32, #tpu.memory_space<vmem>>, %arg6: memref<1x32xf32, #tpu.memory_space<vmem>>, %arg7: memref<2x32xf32, #tpu.memory_space<vmem>>) attributes {dimension_semantics = [#tpu.dimension_semantics<parallel>], iteration_bounds = array<i64: 1>, scalar_prefetch = 0 : i64, scratch_operands = 0 : i64, tpu.core_type = #tpu.core_type<tc>, window_params = [{transform_indices = @transform_0, window_bounds = array<i64: 2, 32>}, {transform_indices = @transform_1, window_bounds = array<i64: 2, 8, 32>}, {pipeline_mode = #tpu.pipeline_mode<synchronous>, transform_indices = @transform_2, window_bounds = array<i64: 32, 32>}, {pipeline_mode = #tpu.pipeline_mode<synchronous>, transform_indices = @transform_3, window_bounds = array<i64: 32, 32>}, {pipeline_mode = #tpu.pipeline_mode<synchronous>, transform_indices = @transform_4, window_bounds = array<i64: 1, 32>}, {pipeline_mode = #tpu.pipeline_mode<synchronous>, transform_indices = @transform_5, window_bounds = array<i64: 1, 32>}, {transform_indices = @transform_6, window_bounds = array<i64: 2, 32>}]} {
    %c0 = arith.constant 0 : index
    %c0_0 = arith.constant 0 : index
    %c0_1 = arith.constant 0 : index
    %0 = vector.load %arg2[%c0, %c0_0, %c0_1] : memref<2x8x32xf32, #tpu.memory_space<vmem>>, vector<2x8x32xf32>
    %1 = vector.shape_cast %0 : vector<2x8x32xf32> to vector<16x32xf32>
    %c0_2 = arith.constant 0 : index
    %c0_3 = arith.constant 0 : index
    %2 = vector.load %arg4[%c0_2, %c0_3] : memref<32x32xf32, #tpu.memory_space<vmem>>, vector<32x32xf32>
    %cst = arith.constant dense<0.000000e+00> : vector<16x32xf32>
    %3 = tpu.matmul %1, %2, %cst {dimension_numbers = #tpu.dot_dimension_numbers<[1], [0], [0], [1], [0, 0, 1, 1], [], []>} : vector<16x32xf32>, vector<32x32xf32>, vector<16x32xf32> -> vector<16x32xf32>
    %c0_4 = arith.constant 0 : index
    %c0_5 = arith.constant 0 : index
    %4 = vector.load %arg1[%c0_4, %c0_5] : memref<2x32xf32, #tpu.memory_space<vmem>>, vector<2x32xf32>
    %c0_6 = arith.constant 0 : index
    %c0_7 = arith.constant 0 : index
    %5 = vector.load %arg3[%c0_6, %c0_7] : memref<32x32xf32, #tpu.memory_space<vmem>>, vector<32x32xf32>
    %cst_8 = arith.constant dense<0.000000e+00> : vector<2x32xf32>
    %6 = tpu.matmul %4, %5, %cst_8 {dimension_numbers = #tpu.dot_dimension_numbers<[1], [0], [0], [1], [0, 0, 1, 1], [], []>} : vector<2x32xf32>, vector<32x32xf32>, vector<2x32xf32> -> vector<2x32xf32>
    %c0_9 = arith.constant 0 : index
    %c0_10 = arith.constant 0 : index
    %7 = vector.load %arg5[%c0_9, %c0_10] : memref<1x32xf32, #tpu.memory_space<vmem>>, vector<1x32xf32>
    %8 = vector.broadcast %7 : vector<1x32xf32> to vector<2x32xf32>
    %9 = arith.addf %6, %8 : vector<2x32xf32>
    %10 = tpu.iota {dimensions = array<i32: 0>} : vector<16x2xi32>
    %11 = tpu.iota {dimensions = array<i32: 1>} : vector<16x2xi32>
    %c8_i32 = arith.constant 8 : i32
    %12 = vector.broadcast %c8_i32 : i32 to vector<16x2xi32>
    %13 = arith.muli %11, %12 : vector<16x2xi32>
    %14 = arith.cmpi sge, %10, %13 : vector<16x2xi32>
    %c1_i32 = arith.constant 1 : i32
    %15 = vector.broadcast %c1_i32 : i32 to vector<16x2xi32>
    %16 = arith.addi %11, %15 : vector<16x2xi32>
    %c8_i32_11 = arith.constant 8 : i32
    %17 = vector.broadcast %c8_i32_11 : i32 to vector<16x2xi32>
    %18 = arith.muli %16, %17 : vector<16x2xi32>
    %19 = arith.cmpi slt, %10, %18 : vector<16x2xi32>
    %20 = arith.andi %14, %19 : vector<16x2xi1>
    %21 = arith.extui %20 : vector<16x2xi1> to vector<16x2xi32>
    %22 = arith.sitofp %21 : vector<16x2xi32> to vector<16x2xf32>
    %cst_12 = arith.constant dense<0.000000e+00> : vector<16x32xf32>
    %23 = tpu.matmul %22, %9, %cst_12 {dimension_numbers = #tpu.dot_dimension_numbers<[1], [0], [0], [1], [0, 0, 1, 1], [], []>} : vector<16x2xf32>, vector<2x32xf32>, vector<16x32xf32> -> vector<16x32xf32>
    %24 = arith.addf %3, %23 : vector<16x32xf32>
    %25 = math.tanh %24 : vector<16x32xf32>
    %c0_13 = arith.constant 0 : index
    %c0_14 = arith.constant 0 : index
    %26 = vector.load %arg6[%c0_13, %c0_14] : memref<1x32xf32, #tpu.memory_space<vmem>>, vector<1x32xf32>
    %27 = vector.broadcast %26 : vector<1x32xf32> to vector<16x32xf32>
    %28 = arith.mulf %25, %27 : vector<16x32xf32>
    %cst_15 = arith.constant dense<0.000000e+00> : vector<16xf32>
    %29 = vector.multi_reduction <add>, %28, %cst_15 [1] : vector<16x32xf32> to vector<16xf32>
    %30 = vector.shape_cast %29 : vector<16xf32> to vector<16x1xf32>
    %31 = vector.shape_cast %30 : vector<16x1xf32> to vector<2x8x1xf32>
    %cst_16 = arith.constant dense<0xFF800000> : vector<2x1xf32>
    %32 = vector.multi_reduction <maximumf>, %31, %cst_16 [1] : vector<2x8x1xf32> to vector<2x1xf32>
    %33 = vector.shape_cast %32 : vector<2x1xf32> to vector<2x1x1xf32>
    %34 = vector.broadcast %33 : vector<2x1x1xf32> to vector<2x8x1xf32>
    %35 = arith.subf %31, %34 : vector<2x8x1xf32>
    %36 = math.exp %35 : vector<2x8x1xf32>
    %cst_17 = arith.constant dense<0.000000e+00> : vector<2x1xf32>
    %37 = vector.multi_reduction <add>, %36, %cst_17 [1] : vector<2x8x1xf32> to vector<2x1xf32>
    %38 = vector.shape_cast %37 : vector<2x1xf32> to vector<2x1x1xf32>
    %39 = tpu.reciprocal %38 : vector<2x1x1xf32> -> vector<2x1x1xf32>
    %40 = vector.broadcast %39 : vector<2x1x1xf32> to vector<2x8x1xf32>
    %41 = arith.mulf %36, %40 : vector<2x8x1xf32>
    %42 = vector.broadcast %41 : vector<2x8x1xf32> to vector<2x8x32xf32>
    %43 = arith.mulf %42, %0 : vector<2x8x32xf32>
    %cst_18 = arith.constant dense<0.000000e+00> : vector<2x32xf32>
    %44 = vector.multi_reduction <add>, %43, %cst_18 [1] : vector<2x8x32xf32> to vector<2x32xf32>
    %c0_19 = arith.constant 0 : index
    %c0_20 = arith.constant 0 : index
    %45 = vector.load %arg7[%c0_19, %c0_20] : memref<2x32xf32, #tpu.memory_space<vmem>>, vector<2x32xf32>
    tpu.vector_store %arg7[%c0_19, %c0_20], %44 {strides = array<i32>} : memref<2x32xf32, #tpu.memory_space<vmem>>, vector<2x32xf32>,
    return
  }
  func.func @transform_0(%arg0: i32) -> (i32, i32) {
    %c0_i32 = arith.constant 0 : i32
    %c0_i32_0 = arith.constant 0 : i32
    return %arg0, %c0_i32 : i32, i32
  }
  func.func @transform_1(%arg0: i32) -> (i32, i32, i32) {
    %c0_i32 = arith.constant 0 : i32
    %c0_i32_0 = arith.constant 0 : i32
    %c0_i32_1 = arith.constant 0 : i32
    return %arg0, %c0_i32, %c0_i32_0 : i32, i32, i32
  }
  func.func @transform_2(%arg0: i32) -> (i32, i32) {
    %c0_i32 = arith.constant 0 : i32
    %c0_i32_0 = arith.constant 0 : i32
    %c0_i32_1 = arith.constant 0 : i32
    return %c0_i32, %c0_i32_0 : i32, i32
  }
  func.func @transform_3(%arg0: i32) -> (i32, i32) {
    %c0_i32 = arith.constant 0 : i32
    %c0_i32_0 = arith.constant 0 : i32
    %c0_i32_1 = arith.constant 0 : i32
    return %c0_i32, %c0_i32_0 : i32, i32
  }
  func.func @transform_4(%arg0: i32) -> (i32, i32) {
    %c0_i32 = arith.constant 0 : i32
    %c0_i32_0 = arith.constant 0 : i32
    %c0_i32_1 = arith.constant 0 : i32
    return %c0_i32, %c0_i32_0 : i32, i32
  }
  func.func @transform_5(%arg0: i32) -> (i32, i32) {
    %c0_i32 = arith.constant 0 : i32
    %c0_i32_0 = arith.constant 0 : i32
    %c0_i32_1 = arith.constant 0 : i32
    return %c0_i32, %c0_i32_0 : i32, i32
  }
  func.func @transform_6(%arg0: i32) -> (i32, i32) {
    %c0_i32 = arith.constant 0 : i32
    %c0_i32_0 = arith.constant 0 : i32
    return %arg0, %c0_i32 : i32, i32
  }
}

</mosaic_0001>

<llo_original>
// kernel: tpu_custom_call.1
$region0: #{tpu_custom_call.1}
  #allocation0 [shape = 'u32[]', space=smem, size = 0x4, offset = 0x4, fixed_abs, tag = 'smem constant byte address 0x4 - core index']
  #allocation1 [shape = 'u32[72,128]{1,0:T(1,128)}', space=vmem, size = 0x9000, scoped, tag = 'internal scratch']
  %s0 = inlined_call_operand.hbm [shape: f32[2,32], index: 0, kind: input, shape index: {}]
  %s1 = inlined_call_operand.hbm [shape: f32[2,8,32], index: 1, kind: input, shape index: {}]
  %s2 = inlined_call_operand.hbm [shape: f32[32,32], index: 2, kind: input, shape index: {}]
  %s3 = inlined_call_operand.hbm [shape: f32[32,32], index: 3, kind: input, shape index: {}]
  %s4 = inlined_call_operand.vmem [shape: f32[1,32], index: 4, kind: input, shape index: {}]
  %s5 = inlined_call_operand.vmem [shape: f32[1,32], index: 5, kind: input, shape index: {}]
  %s6 = inlined_call_operand.hbm [shape: f32[2,32], index: 6, kind: output, shape index: {}]
  %s7 = sld [smem:[#allocation0]]
  $region50: #{tpu_custom_call.1} parent=0
    _
  %s9 = ssub.s32 1, %s7
  %s10 = scalar_select 0, %s9, %s7
  $region1: #{tpu_custom_call.1} parent=0
    #allocation2 [shape = 'u8[1024]{0}', space=vmem, size = 0x400, scoped, tag = 'input window, operand 0, single buffered']
    #allocation3 [shape = 's32[1]{0}', space=sflag, size = 0x4, scoped, tag = 'scoped memory for tpu_custom_call.1']
    #allocation4 [shape = 's32[1]{0}', space=sflag, size = 0x4, scoped, tag = 'scoped memory for tpu_custom_call.1']
    #allocation5 [shape = 'u8[8192]{0}', space=vmem, size = 0x2000, scoped, tag = 'input window, operand 1, single buffered']
    #allocation6 [shape = 's32[1]{0}', space=sflag, size = 0x4, scoped, tag = 'scoped memory for tpu_custom_call.1']
    #allocation7 [shape = 'u8[16384]{0}', space=vmem, size = 0x4000, scoped, tag = 'input window, operand 2, single buffered']
    #allocation8 [shape = 'u8[16384]{0}', space=vmem, size = 0x4000, scoped, tag = 'input window, operand 3, single buffered']
    #allocation9 [shape = 's32[1]{0}', space=sflag, size = 0x4, scoped, tag = 'scoped memory for tpu_custom_call.1']
    #allocation10 [shape = 'u8[1024]{0}', space=vmem, size = 0x400, scoped, tag = 'output window, operand 0, single buffered']
    %11 = vsyncpa [#allocation3], 0
    %12 = vsyncpa [#allocation6], 0
    %13 = vsyncpa [#allocation9], 0
    %14 = vsyncpa [#allocation4], 0
    // Predicated region
    $region2: #{tpu_custom_call.1} parent=1 // pred_check
      _
    $region3: #{tpu_custom_call.1} parent=1 // pred_check_branch
      %16 = sbr.rel (0) target = $region5
    $region4: #{tpu_custom_call.1} parent=1 // pred_region
      %18 = vsyncadd [#allocation3], 0
      %s20 = sshll.u32 %s0, 4
      %s21 = int_to_ptr.hbm [resolvable:$true] %s20
      %s22 = sshll.u32 [#allocation2], 4
      %s23 = int_to_ptr.vmem [resolvable:$true] %s22
      %25 = dma.hbm_to_vmem [thread:$0]  %s21, 32, %s23, [#allocation3]
    $region5: #{tpu_custom_call.1} parent=1 // pred_fallthru
      _
    // Predicated region
    $region6: #{tpu_custom_call.1} parent=1 // pred_check
      _
    $region7: #{tpu_custom_call.1} parent=1 // pred_check_branch
      %27 = sbr.rel (0) target = $region9
    $region8: #{tpu_custom_call.1} parent=1 // pred_region
      %29 = vsyncadd [#allocation6], 0
      %s30 = sshll.u32 %s1, 4
      %s31 = int_to_ptr.hbm [resolvable:$true] %s30
      %s32 = sshll.u32 [#allocation5], 4
      %s33 = int_to_ptr.vmem [resolvable:$true] %s32
      %38 = dma.hbm_to_vmem [thread:$0]  %s31, 256, %s33, [#allocation6], 128, 128, 8
    $region9: #{tpu_custom_call.1} parent=1 // pred_fallthru
      _
    // Predicated region
    $region10: #{tpu_custom_call.1} parent=1 // pred_check
      _
    $region11: #{tpu_custom_call.1} parent=1 // pred_check_branch
      %40 = sbr.rel (0) target = $region13
    $region12: #{tpu_custom_call.1} parent=1 // pred_region
      %42 = vsyncadd [#allocation6], 0
      %s43 = sshll.u32 %s2, 4
      %s44 = int_to_ptr.hbm [resolvable:$true] %s43
      %s45 = sshll.u32 [#allocation7], 4
      %s46 = int_to_ptr.vmem [resolvable:$true] %s45
      %51 = dma.hbm_to_vmem [thread:$0]  %s44, 512, %s46, [#allocation6], 128, 128, 8
    $region13: #{tpu_custom_call.1} parent=1 // pred_fallthru
      _
    // Predicated region
    $region14: #{tpu_custom_call.1} parent=1 // pred_check
      _
    $region15: #{tpu_custom_call.1} parent=1 // pred_check_branch
      %53 = sbr.rel (0) target = $region17
    $region16: #{tpu_custom_call.1} parent=1 // pred_region
      %55 = vsyncadd [#allocation9], 0
      %s56 = sshll.u32 %s3, 4
      %s57 = int_to_ptr.hbm [resolvable:$true] %s56
      %s58 = sshll.u32 [#allocation8], 4
      %s59 = int_to_ptr.vmem [resolvable:$true] %s58
      %64 = dma.hbm_to_vmem [thread:$0]  %s57, 512, %s59, [#allocation9], 128, 128, 8
    $region17: #{tpu_custom_call.1} parent=1 // pred_fallthru
      _
    // Predicated region
    $region18: #{tpu_custom_call.1} parent=1 // pred_check
      _
    $region19: #{tpu_custom_call.1} parent=1 // pred_check_branch
      %66 = sbr.rel (0) target = $region21
    $region20: #{tpu_custom_call.1} parent=1 // pred_region
      _
    $region21: #{tpu_custom_call.1} parent=1 // pred_fallthru
      _
    // Predicated region
    $region22: #{tpu_custom_call.1} parent=1 // pred_check
      _
    $region23: #{tpu_custom_call.1} parent=1 // pred_check_branch
      %68 = sbr.rel (0) target = $region25
    $region24: #{tpu_custom_call.1} parent=1 // pred_region
      _
    $region25: #{tpu_custom_call.1} parent=1 // pred_fallthru
      _
    // Predicated region
    $region26: #{tpu_custom_call.1} parent=1 // pred_check
      _
    $region27: #{tpu_custom_call.1} parent=1 // pred_check_branch
      %70 = sbr.rel (0) target = $region29
    $region28: #{tpu_custom_call.1} parent=1 // pred_region
      %72 = dma.done [#allocation3], 32
    $region29: #{tpu_custom_call.1} parent=1 // pred_fallthru
      _
    // Predicated region
    $region30: #{tpu_custom_call.1} parent=1 // pred_check
      _
    $region31: #{tpu_custom_call.1} parent=1 // pred_check_branch
      %74 = sbr.rel (0) target = $region33
    $region32: #{tpu_custom_call.1} parent=1 // pred_region
      %76 = dma.done [#allocation6], 256
    $region33: #{tpu_custom_call.1} parent=1 // pred_fallthru
      _
    // Predicated region
    $region34: #{tpu_custom_call.1} parent=1 // pred_check
      _
    $region35: #{tpu_custom_call.1} parent=1 // pred_check_branch
      %78 = sbr.rel (0) target = $region37
    $region36: #{tpu_custom_call.1} parent=1 // pred_region
      %80 = dma.done [#allocation6], 512
    $region37: #{tpu_custom_call.1} parent=1 // pred_fallthru
      _
    // Predicated region
    $region38: #{tpu_custom_call.1} parent=1 // pred_check
      _
    $region39: #{tpu_custom_call.1} parent=1 // pred_check_branch
      %82 = sbr.rel (0) target = $region41
    $region40: #{tpu_custom_call.1} parent=1 // pred_region
      %84 = dma.done [#allocation9], 512
    $region41: #{tpu_custom_call.1} parent=1 // pred_fallthru
      _
    %v85 = vld [vmem:[#allocation5] sm:$0xff]
    %v86 = vld [vmem:[#allocation5 + $0x8] sm:$0xff]
    %v87 = vld [vmem:[#allocation8] sm:$0xff]
    %v88 = vld [vmem:[#allocation8 + $0x8] sm:$0xff]
    %v89 = vld [vmem:[#allocation8 + $0x10] sm:$0xff]
    %v90 = vld [vmem:[#allocation8 + $0x18] sm:$0xff]
    %v91 = vld [vmem:[#allocation2] sm:$0x3]
    %v92 = vld [vmem:[#allocation7] sm:$0xff]
    %v93 = vld [vmem:[#allocation7 + $0x8] sm:$0xff]
    %v94 = vld [vmem:[#allocation7 + $0x10] sm:$0xff]
    %v95 = vld [vmem:[#allocation7 + $0x18] sm:$0xff]
    %v96 = vld [vmem:[%s4] sm:$0x1]
    %v98 = vperm.slane %v96, 0
    %vm100 = vcmask 261120
    %v102 = vsel %vm100, %v91, 0
    %104 = vmatpush.msra.mxu0 0.0
    %105 = vmatpush.msra.mxu0 0.0
    %106 = vmatpush.msra.mxu0 0.0
    %107 = vmatpush.msra.mxu0 0.0
    %108 = vmatpush.msra.mxu0 0.0
    %109 = vmatpush.msra.mxu0 0.0
    %110 = vmatpush.msra.mxu0 0.0
    %111 = vmatpush.msra.mxu0 0.0
    %112 = vmatpush.msra.mxu0 0.0
    %113 = vmatpush.msra.mxu0 0.0
    %114 = vmatpush.msra.mxu0 0.0
    %115 = vmatpush.msra.mxu0 0.0
    %116 = vmatpush.msra.mxu0 %v95
    %117 = vmatpush.msra.mxu0 %v94
    %118 = vmatpush.msra.mxu0 %v93
    %119 = vmatpush.msra.mxu0 %v92
    %120 = vmatmul.f32.gmra.mxu0 %v102
    %v121 = vpop.f32.mrf.mxu0
    %v122 = vadd.f32 %v98, %v121
    %123 = vdwg.mxu0
    %v124 = vlaneseq
    %v125 = vshrl.u32 %v124, 7
    %v126 = vadd.s32 %v125, 8
    %v127 = vlaneseq
    %v128 = vand.u32 %v127, 127
    %v129 = vmul.u32 %v128, 8
    %vm130 = vcmp.ge.s32.totalorder %v125, %v129
    %vm131 = vcmp.ge.s32.totalorder %v126, %v129
    %v132 = vadd.s32 %v128, 1
    %v133 = vmul.u32 %v132, 8
    %vm134 = vcmp.lt.s32.totalorder %v125, %v133
    %vm135 = vcmp.lt.s32.totalorder %v126, %v133
    %vm136 = vmand %vm130, %vm134
    %vm137 = vmand %vm131, %vm135
    %v138 = vsel %vm136, 1, 0
    %v139 = vsel %vm137, 1, 0
    %v140 = vcvt.s32.f32 %v138
    %v141 = vcvt.s32.f32 %v139
    %vm142 = vcmask 15360
    %v144 = vsel %vm142, %v140, 0
    %v147 = vsel %vm142, %v141, 0
    %vm149 = vcmask 1041408
    %v151 = vsel %vm149, %v122, 0
    %153 = vmatpush.msra.mxu0 0.0
    %154 = vmatpush.msra.mxu0 0.0
    %155 = vmatpush.msra.mxu0 0.0
    %156 = vmatpush.msra.mxu0 0.0
    %157 = vmatpush.msra.mxu0 0.0
    %158 = vmatpush.msra.mxu0 0.0
    %159 = vmatpush.msra.mxu0 0.0
    %160 = vmatpush.msra.mxu0 0.0
    %161 = vmatpush.msra.mxu0 0.0
    %162 = vmatpush.msra.mxu0 0.0
    %163 = vmatpush.msra.mxu0 0.0
    %164 = vmatpush.msra.mxu0 0.0
    %165 = vmatpush.msra.mxu0 0.0
    %166 = vmatpush.msra.mxu0 0.0
    %167 = vmatpush.msra.mxu0 0.0
    %168 = vmatpush.msra.mxu0 %v151
    %169 = vmatmul.f32.gmra.mxu0 %v144
    %v170 = vpop.f32.mrf.mxu0
    %v171 = vadd.f32 0.0, %v170
    %172 = vmatmul.f32.gmra.mxu0 %v147
    %v173 = vpop.f32.mrf.mxu0
    %v174 = vadd.f32 0.0, %v173
    %175 = vdwg.mxu0
    %v177 = vsel %vm100, %v85, 0
    %v180 = vsel %vm100, %v86, 0
    %182 = vmatpush.msra.mxu0 0.0
    %183 = vmatpush.msra.mxu0 0.0
    %184 = vmatpush.msra.mxu0 0.0
    %185 = vmatpush.msra.mxu0 0.0
    %186 = vmatpush.msra.mxu0 0.0
    %187 = vmatpush.msra.mxu0 0.0
    %188 = vmatpush.msra.mxu0 0.0
    %189 = vmatpush.msra.mxu0 0.0
    %190 = vmatpush.msra.mxu0 0.0
    %191 = vmatpush.msra.mxu0 0.0
    %192 = vmatpush.msra.mxu0 0.0
    %193 = vmatpush.msra.mxu0 0.0
    %194 = vmatpush.msra.mxu0 %v90
    %195 = vmatpush.msra.mxu0 %v89
    %196 = vmatpush.msra.mxu0 %v88
    %197 = vmatpush.msra.mxu0 %v87
    %198 = vmatmul.f32.gmra.mxu0 %v177
    %v199 = vpop.f32.mrf.mxu0
    %v200 = vadd.f32 %v171, %v199
    %201 = vmatmul.f32.gmra.mxu0 %v180
    %v202 = vpop.f32.mrf.mxu0
    %v203 = vadd.f32 %v174, %v202
    %204 = vdwg.mxu0
    %v205 = vtanh.pop %v200
    %v206 = vtanh.pop %v203
    %v207 = vld [vmem:[%s5] sm:$0x1]
    %v209 = vperm.slane %v207, 0
    %v211 = vmul.f32 %v205, %v209
    %v212 = vmul.f32 %v206, %v209
    %v213 = vsel %vm100, %v211, 0.0
    %214 = vadd.xlane.f32.xlu0 %v213
    %v215 = vpop.xlane.xlu0 %214
    %v216 = vsel %vm100, %v212, 0.0
    %217 = vadd.xlane.f32.xlu0 %v216
    %v218 = vpop.xlane.xlu0 %217
    %v219 = vrot.slane %v215, 4
    %v220 = vmax.f32 %v215, %v219
    %v221 = vrot.slane %v220, 2
    %v222 = vmax.f32 %v220, %v221
    %v223 = vrot.slane %v222, 1
    %v224 = vmax.f32 %v222, %v223
    %v225 = vrot.slane %v218, 4
    %v226 = vmax.f32 %v218, %v225
    %v227 = vrot.slane %v226, 2
    %v228 = vmax.f32 %v226, %v227
    %v229 = vrot.slane %v228, 1
    %v230 = vmax.f32 %v228, %v229
    %v231 = vsub.f32 %v215, %v224
    %v232 = vsub.f32 %v218, %v230
    %v233 = vmul.f32 %v231, 1.442695
    %v234 = vpow.pop %v233
    %v235 = vmul.f32 %v232, 1.442695
    %v236 = vpow.pop %v235
    %v237 = vrot.slane %v234, 4
    %v238 = vadd.f32 %v234, %v237
    %v239 = vrot.slane %v238, 2
    %v240 = vadd.f32 %v238, %v239
    %v241 = vrot.slane %v240, 1
    %v242 = vadd.f32 %v240, %v241
    %v243 = vrot.slane %v236, 4
    %v244 = vadd.f32 %v236, %v243
    %v245 = vrot.slane %v244, 2
    %v246 = vadd.f32 %v244, %v245
    %v247 = vrot.slane %v246, 1
    %v248 = vadd.f32 %v246, %v247
    %v249 = vrcp.pop %v242
    %v250 = vmul.f32 %v242, %v249
    %v251 = vsub.f32 1.0, %v250
    %v252 = vmul.f32 %v249, %v251
    %v253 = vadd.f32 %v249, %v252
    %vm254 = vweird.f32 %v242
    %vm255 = vweird.f32 %v249
    %vm256 = vmor %vm254, %vm255
    %v257 = vsel %vm256, %v249, %v253
    %v258 = vand.u32 2147483647, %v242
    %vm259 = vcmp.eq.f32.partialorder %v258, 8.507059e+37
    %v260 = vand.u32 %v242, 2147483648
    %v261 = vor.u32 1.1754944e-38, %v260
    %v262 = vsel %vm259, %v261, %v257
    %v263 = vrcp.pop %v248
    %v264 = vmul.f32 %v248, %v263
    %v265 = vsub.f32 1.0, %v264
    %v266 = vmul.f32 %v263, %v265
    %v267 = vadd.f32 %v263, %v266
    %vm268 = vweird.f32 %v248
    %vm269 = vweird.f32 %v263
    %vm270 = vmor %vm268, %vm269
    %v271 = vsel %vm270, %v263, %v267
    %v272 = vand.u32 2147483647, %v248
    %vm273 = vcmp.eq.f32.partialorder %v272, 8.507059e+37
    %v274 = vand.u32 %v248, 2147483648
    %v275 = vor.u32 1.1754944e-38, %v274
    %v276 = vsel %vm273, %v275, %v271
    %v277 = vmul.f32 %v234, %v262
    %v278 = vmul.f32 %v236, %v276
    %v279 = vmul.f32 %v277, %v85
    %v280 = vmul.f32 %v278, %v86
    %v281 = vsel %vm100, %v279, 0.0
    %v282 = vrot.slane %v281, 4
    %v283 = vadd.f32 %v281, %v282
    %v284 = vrot.slane %v283, 2
    %v285 = vadd.f32 %v283, %v284
    %v286 = vrot.slane %v285, 1
    %v287 = vadd.f32 %v285, %v286
    %v288 = vsel %vm100, %v280, 0.0
    %v289 = vrot.slane %v288, 4
    %v290 = vadd.f32 %v288, %v289
    %v291 = vrot.slane %v290, 2
    %v292 = vadd.f32 %v290, %v291
    %v293 = vrot.slane %v292, 1
    %v294 = vadd.f32 %v292, %v293
    %vm297 = vcmask 1041409
    %v298 = vsel %vm297, %v294, %v287
    %vm300 = vcmask 254976
    %301 = vst.msk [vmem:[#allocation10] sm:$0x3] %vm300, %v298
    // Predicated region
    $region42: #{tpu_custom_call.1} parent=1 // pred_check
      _
    $region43: #{tpu_custom_call.1} parent=1 // pred_check_branch
      %303 = sbr.rel (0) target = $region45
    $region44: #{tpu_custom_call.1} parent=1 // pred_region
      %305 = vsyncadd [#allocation4], 0
      %s307 = sshll.u32 [#allocation10], 4
      %s308 = int_to_ptr.vmem [resolvable:$true] %s307
      %s309 = sshll.u32 %s6, 4
      %s310 = int_to_ptr.hbm [resolvable:$true] %s309
      %312 = dma.vmem_to_hbm [thread:$0]  %s308, 32, %s310, [#allocation4]
    $region45: #{tpu_custom_call.1} parent=1 // pred_fallthru
      _
    // Predicated region
    $region46: #{tpu_custom_call.1} parent=1 // pred_check
      _
    $region47: #{tpu_custom_call.1} parent=1 // pred_check_branch
      %314 = sbr.rel (0) target = $region49
    $region48: #{tpu_custom_call.1} parent=1 // pred_region
      %316 = dma.done [#allocation4], 32
    $region49: #{tpu_custom_call.1} parent=1 // pred_fallthru
      _
    %317 = vsyncpa [#allocation3], 1
    %318 = vsyncpa [#allocation6], 1
    %319 = vsyncpa [#allocation9], 1
    %320 = vsyncpa [#allocation4], 1

</llo_original>
